<compile_context>
chip_gen: v7x
topology: tpu7x:2x2x1
jax: 0.10.0
libtpu: 0.0.40
codegen_flags: <defaults>
</compile_context>

<pallas_src>
import jax
import jax.numpy as jnp
from jax.experimental import pallas as pl
from jax.experimental.pallas import tpu as pltpu


def _round_up(x, m):
    return ((x + m - 1) // m) * m


def _head_kernel(x_ref, w_ref, b_ref, o_ref):
    # Single MXU contraction over K = 2*emb_size with f32 accumulation.
    acc = jnp.dot(x_ref[...], w_ref[...], preferred_element_type=jnp.float32)
    # Bias already holds 0.5*(b_cls + b_dist); 0.5 is folded into the weights,
    # so the body is just dot + bias add + cast.
    o_ref[...] = (acc + b_ref[...]).astype(o_ref.dtype)


def prepare_head_params(w_cls, b_cls, w_dist, b_dist,
                        *, compute_dtype=jnp.bfloat16):
    """One-time (init-time) fused-weight preparation.

    w_cls/w_dist: [E, C] stored [in, out] (i.e. W^T vs torch), b_*: [C].
    Folds the two Linears into one [2E, C_pad] contraction with the 0.5
    average folded into weights + bias, class dim zero-padded to 128 for
    lane-dense stores, and the weight cast to the MXU compute dtype.
    """
    E, C = w_cls.shape
    C_pad = _round_up(C, 128)

    w_comb = (jnp.concatenate([w_cls, w_dist], axis=0) * 0.5)        # [2E, C]
    b_comb = ((b_cls + b_dist) * 0.5).astype(jnp.float32)            # [C]

    w_comb = w_comb.astype(compute_dtype)
    if C_pad != C:
        w_comb = jnp.pad(w_comb, ((0, 0), (0, C_pad - C)))
        b_comb = jnp.pad(b_comb, (0, C_pad - C))
    b_comb = b_comb.reshape(1, C_pad)

    return dict(w=w_comb, b=b_comb, emb_size=E, n_classes=C, c_pad=C_pad,
                compute_dtype=compute_dtype)


def student_classification_head(x, params, *, block_b=256, block_c=512,
                                out_dtype=None,
                                vmem_budget_bytes=12 * 1024 * 1024):
    """Eval-mode forward. x: [B, 2, E] -> [B, n_classes]."""
    B, T, E = x.shape
    assert T == 2 and E == params["emb_size"]
    C, C_pad = params["n_classes"], params["c_pad"]
    w, bias = params["w"], params["b"]
    compute_dtype = params["compute_dtype"]
    # Default output dtype matches the input; pass out_dtype=jnp.bfloat16 to
    # halve output HBM writeback if downstream accepts it.
    out_dtype = x.dtype if out_dtype is None else out_dtype

    K = 2 * E
    itemsize = jnp.dtype(compute_dtype).itemsize
    out_itemsize = jnp.dtype(out_dtype).itemsize
    row_align = {1: 32, 2: 16, 4: 8}.get(itemsize, 8)

    # ---- batch tile (sublane/packing aligned) -----------------------------
    tb = min(block_b, _round_up(B, row_align))
    B_pad = _round_up(B, tb)

    # ---- weight-resident vs class-tiled dispatch ---------------------------
    w_bytes = K * C_pad * itemsize
    weight_resident = (2 * w_bytes                    # (possibly) double-buffered W
                       + 2 * tb * K * itemsize        # double-buffered x tile
                       + 2 * tb * C_pad * out_itemsize  # double-buffered out tile
                       ) <= vmem_budget_bytes

    if weight_resident:
        # v7x has 2 TensorCores: make sure the single parallel axis has >= 2
        # blocks whenever there is enough batch to split.
        if B_pad // tb == 1 and B > row_align:
            tb = _round_up(-(-B // 2), row_align)
            B_pad = 2 * tb
        nb = B_pad // tb
        tc = C_pad
        grid = (nb,)
        in_specs = [
            pl.BlockSpec((tb, K), lambda i: (i, 0)),         # x tile, streamed
            pl.BlockSpec((K, C_pad), lambda i: (0, 0)),      # weight, resident
            pl.BlockSpec((1, C_pad), lambda i: (0, 0)),      # bias, resident
        ]
        out_specs = pl.BlockSpec((tb, C_pad), lambda i: (i, 0))
        dim_sem = ("parallel",)
        bytes_accessed = (B_pad * K * itemsize + w_bytes + C_pad * 4
                          + B_pad * C_pad * out_itemsize)
    else:
        # Huge-C fallback (e.g. ImageNet-21k): tile classes, class axis OUTER
        # so each weight tile is DMA'd exactly once; the smaller x operand is
        # re-streamed once per class tile.
        tc = min(block_c, C_pad)
        while C_pad % tc:                 # keep tc a 128-multiple divisor
            tc -= 128
        nb = B_pad // tb
        nc = C_pad // tc
        grid = (nc, nb)
        in_specs = [
            pl.BlockSpec((tb, K), lambda j, i: (i, 0)),
            pl.BlockSpec((K, tc), lambda j, i: (0, j)),
            pl.BlockSpec((1, tc), lambda j, i: (0, j)),
        ]
        out_specs = pl.BlockSpec((tb, tc), lambda j, i: (i, j))
        dim_sem = ("parallel", "parallel")
        bytes_accessed = (nc * B_pad * K * itemsize + w_bytes + C_pad * 4
                          + B_pad * C_pad * out_itemsize)

    # ---- per-call activation prep (cheap: contiguous reshape + cast + pad) -
    x_flat = x.reshape(B, K).astype(compute_dtype)
    if B_pad != B:
        x_flat = jnp.pad(x_flat, ((0, B_pad - B), (0, 0)))

    # ---- VMEM estimate -> explicit scoped limit only when needed ----------
    vmem_est = (2 * (tb * K + K * tc) * itemsize + 2 * tc * 4
                + 2 * tb * tc * out_itemsize)
    cparams = dict(dimension_semantics=dim_sem)
    if vmem_est > 12 * 1024 * 1024:
        cparams["vmem_limit_bytes"] = int(min(vmem_est + (4 << 20), 48 << 20))

    out = pl.pallas_call(
        _head_kernel,
        out_shape=jax.ShapeDtypeStruct((B_pad, C_pad), out_dtype),
        grid=grid,
        in_specs=in_specs,
        out_specs=out_specs,
        compiler_params=pltpu.CompilerParams(**cparams),
        cost_estimate=pl.CostEstimate(
            flops=2 * B_pad * K * C_pad,
            transcendentals=0,
            bytes_accessed=int(bytes_accessed)),
    )(x_flat, w, bias)

    return out[:B, :C]


def _reference(x, w_cls, b_cls, w_dist, b_dist):
    x_cls, x_dist = x[:, 0, :], x[:, 1, :]
    return ((x_cls @ w_cls + b_cls) + (x_dist @ w_dist + b_dist)) / 2.0


if __name__ == "__main__":
    B, E, C = 4, 32, 10  # batch, emb_size, n_classes

    key = jax.random.PRNGKey(0)
    kx, kw1, kb1, kw2, kb2 = jax.random.split(key, 5)

    # Deterministic synthetic parameters (PyTorch Linear-style uniform init).
    bound = 1.0 / jnp.sqrt(E)
    x = jax.random.normal(kx, (B, 2, E), dtype=jnp.float32)
    w_cls = jax.random.uniform(kw1, (E, C), minval=-bound, maxval=bound,
                               dtype=jnp.float32)
    b_cls = jax.random.uniform(kb1, (C,), minval=-bound, maxval=bound,
                               dtype=jnp.float32)
    w_dist = jax.random.uniform(kw2, (E, C), minval=-bound, maxval=bound,
                                dtype=jnp.float32)
    b_dist = jax.random.uniform(kb2, (C,), minval=-bound, maxval=bound,
                                dtype=jnp.float32)

    # One-time weight prep (init-time), then the per-call kernel.
    params = prepare_head_params(w_cls, b_cls, w_dist, b_dist)
    out = student_classification_head(x, params)
    out = jax.block_until_ready(out)

    assert out.shape == (B, C)

    # bf16 operands -> compare loosely against the f32 reference.
    ref_f32 = _reference(x, w_cls, b_cls, w_dist, b_dist)
    assert jnp.allclose(out, ref_f32, atol=2e-2, rtol=2e-2), \
        "mismatch vs f32 reference"

    # Tighter check against a reference using the same bf16-cast operands
    # (isolates kernel math from the bf16 cast error).
    xb = x.astype(jnp.bfloat16).astype(jnp.float32)
    wcb2 = (jnp.concatenate([w_cls, w_dist], axis=0) * 0.5) \
        .astype(jnp.bfloat16).astype(jnp.float32)
    ref_bf16 = xb.reshape(B, 2 * E) @ wcb2 + 0.5 * (b_cls + b_dist)
    assert jnp.allclose(out, ref_bf16, atol=1e-3, rtol=1e-3), \
        "mismatch vs bf16-operand reference"

    # TODO(synk): training-mode branch returns the (cls, dist) tuple
    # un-averaged; only the eval-mode fused output is implemented here.
    print("KERNEL_OK")
</pallas_src>

<mosaic_0001>
module attributes {stable_mosaic.version = 11 : i64} {
  func.func @_head_kernel(%arg0: i32, %arg1: memref<16x64xbf16, #tpu.memory_space<vmem>>, %arg2: memref<64x128xbf16, #tpu.memory_space<vmem>>, %arg3: memref<1x128xf32, #tpu.memory_space<vmem>>, %arg4: memref<16x128xf32, #tpu.memory_space<vmem>>) attributes {dimension_semantics = [#tpu.dimension_semantics<parallel>], iteration_bounds = array<i64: 1>, scalar_prefetch = 0 : i64, scratch_operands = 0 : i64, tpu.core_type = #tpu.core_type<tc>, window_params = [{transform_indices = @transform_0, window_bounds = array<i64: 16, 64>}, {pipeline_mode = #tpu.pipeline_mode<synchronous>, transform_indices = @transform_1, window_bounds = array<i64: 64, 128>}, {pipeline_mode = #tpu.pipeline_mode<synchronous>, transform_indices = @transform_2, window_bounds = array<i64: 1, 128>}, {transform_indices = @transform_3, window_bounds = array<i64: 16, 128>}]} {
    %c0 = arith.constant 0 : index
    %c0_0 = arith.constant 0 : index
    %0 = vector.load %arg1[%c0, %c0_0] : memref<16x64xbf16, #tpu.memory_space<vmem>>, vector<16x64xbf16>
    %c0_1 = arith.constant 0 : index
    %c0_2 = arith.constant 0 : index
    %1 = vector.load %arg2[%c0_1, %c0_2] : memref<64x128xbf16, #tpu.memory_space<vmem>>, vector<64x128xbf16>
    %cst = arith.constant dense<0.000000e+00> : vector<16x128xf32>
    %2 = tpu.matmul %0, %1, %cst {dimension_numbers = #tpu.dot_dimension_numbers<[1], [0], [0], [1], [0, 0, 1, 1], [], []>} : vector<16x64xbf16>, vector<64x128xbf16>, vector<16x128xf32> -> vector<16x128xf32>
    %c0_3 = arith.constant 0 : index
    %c0_4 = arith.constant 0 : index
    %3 = vector.load %arg3[%c0_3, %c0_4] : memref<1x128xf32, #tpu.memory_space<vmem>>, vector<1x128xf32>
    %4 = vector.broadcast %3 : vector<1x128xf32> to vector<16x128xf32>
    %5 = arith.addf %2, %4 : vector<16x128xf32>
    %c0_5 = arith.constant 0 : index
    %c0_6 = arith.constant 0 : index
    %6 = vector.load %arg4[%c0_5, %c0_6] : memref<16x128xf32, #tpu.memory_space<vmem>>, vector<16x128xf32>
    tpu.vector_store %arg4[%c0_5, %c0_6], %5 {strides = array<i32>} : memref<16x128xf32, #tpu.memory_space<vmem>>, vector<16x128xf32>,
    return
  }
  func.func @transform_0(%arg0: i32) -> (i32, i32) {
    %c0_i32 = arith.constant 0 : i32
    %c0_i32_0 = arith.constant 0 : i32
    return %arg0, %c0_i32 : i32, i32
  }
  func.func @transform_1(%arg0: i32) -> (i32, i32) {
    %c0_i32 = arith.constant 0 : i32
    %c0_i32_0 = arith.constant 0 : i32
    %c0_i32_1 = arith.constant 0 : i32
    return %c0_i32, %c0_i32_0 : i32, i32
  }
  func.func @transform_2(%arg0: i32) -> (i32, i32) {
    %c0_i32 = arith.constant 0 : i32
    %c0_i32_0 = arith.constant 0 : i32
    %c0_i32_1 = arith.constant 0 : i32
    return %c0_i32, %c0_i32_0 : i32, i32
  }
  func.func @transform_3(%arg0: i32) -> (i32, i32) {
    %c0_i32 = arith.constant 0 : i32
    %c0_i32_0 = arith.constant 0 : i32
    return %arg0, %c0_i32 : i32, i32
  }
}

</mosaic_0001>

<llo_original>
// kernel: tpu_custom_call.1
$region0: #{tpu_custom_call.1}
  #allocation0 [shape = 'u32[]', space=smem, size = 0x4, offset = 0x4, fixed_abs, tag = 'smem constant byte address 0x4 - core index']
  #allocation1 [shape = 'u32[144,128]{1,0:T(1,128)}', space=vmem, size = 0x12000, scoped, tag = 'internal scratch']
  %s0 = inlined_call_operand.hbm [shape: bf16[16,64], index: 0, kind: input, shape index: {}]
  %s1 = inlined_call_operand.hbm [shape: bf16[64,128], index: 1, kind: input, shape index: {}]
  %s2 = inlined_call_operand.vmem [shape: f32[1,128], index: 2, kind: input, shape index: {}]
  %s3 = inlined_call_operand.hbm [shape: f32[16,128], index: 3, kind: output, shape index: {}]
  %s4 = sld [smem:[#allocation0]]
  $region30: #{tpu_custom_call.1} parent=0
    _
  %s6 = ssub.s32 1, %s4
  %s7 = scalar_select 0, %s6, %s4
  $region1: #{tpu_custom_call.1} parent=0
    #allocation2 [shape = 'u8[4096]{0}', space=vmem, size = 0x1000, scoped, tag = 'input window, operand 0, single buffered']
    #allocation3 [shape = 's32[1]{0}', space=sflag, size = 0x4, scoped, tag = 'scoped memory for tpu_custom_call.1']
    #allocation4 [shape = 's32[1]{0}', space=sflag, size = 0x4, scoped, tag = 'scoped memory for tpu_custom_call.1']
    #allocation5 [shape = 'u8[16384]{0}', space=vmem, size = 0x4000, scoped, tag = 'input window, operand 1, single buffered']
    #allocation6 [shape = 's32[1]{0}', space=sflag, size = 0x4, scoped, tag = 'scoped memory for tpu_custom_call.1']
    #allocation7 [shape = 'u8[8192]{0}', space=vmem, size = 0x2000, scoped, tag = 'output window, operand 0, single buffered']
    %8 = vsyncpa [#allocation3], 0
    %9 = vsyncpa [#allocation6], 0
    %10 = vsyncpa [#allocation4], 0
    // Predicated region
    $region2: #{tpu_custom_call.1} parent=1 // pred_check
      _
    $region3: #{tpu_custom_call.1} parent=1 // pred_check_branch
      %12 = sbr.rel (0) target = $region5
    $region4: #{tpu_custom_call.1} parent=1 // pred_region
      %s14 = ssub.s32 128, 128
      %15 = vsyncadd [#allocation3], %s14
      %s16 = sshll.u32 [#allocation2], 4
      %s17 = int_to_ptr.vmem [resolvable:$true] %s16
      %22 = dma.hbm_to_vmem [thread:$0]  %s0, 128, %s17, [#allocation3], 64, 64, 4
    $region5: #{tpu_custom_call.1} parent=1 // pred_fallthru
      _
    // Predicated region
    $region6: #{tpu_custom_call.1} parent=1 // pred_check
      _
    $region7: #{tpu_custom_call.1} parent=1 // pred_check_branch
      %24 = sbr.rel (0) target = $region9
    $region8: #{tpu_custom_call.1} parent=1 // pred_region
      %s26 = ssub.s32 512, 512
      %27 = vsyncadd [#allocation6], %s26
      %s28 = sshll.u32 [#allocation5], 4
      %s29 = int_to_ptr.vmem [resolvable:$true] %s28
      %34 = dma.hbm_to_vmem [thread:$0]  %s1, 512, %s29, [#allocation6], 64, 64, 4
    $region9: #{tpu_custom_call.1} parent=1 // pred_fallthru
      _
    // Predicated region
    $region10: #{tpu_custom_call.1} parent=1 // pred_check
      _
    $region11: #{tpu_custom_call.1} parent=1 // pred_check_branch
      %36 = sbr.rel (0) target = $region13
    $region12: #{tpu_custom_call.1} parent=1 // pred_region
      _
    $region13: #{tpu_custom_call.1} parent=1 // pred_fallthru
      _
    // Predicated region
    $region14: #{tpu_custom_call.1} parent=1 // pred_check
      _
    $region15: #{tpu_custom_call.1} parent=1 // pred_check_branch
      %38 = sbr.rel (0) target = $region17
    $region16: #{tpu_custom_call.1} parent=1 // pred_region
      %39 = dma.done [#allocation3], 128
    $region17: #{tpu_custom_call.1} parent=1 // pred_fallthru
      _
    // Predicated region
    $region18: #{tpu_custom_call.1} parent=1 // pred_check
      _
    $region19: #{tpu_custom_call.1} parent=1 // pred_check_branch
      %41 = sbr.rel (0) target = $region21
    $region20: #{tpu_custom_call.1} parent=1 // pred_region
      %42 = dma.done [#allocation6], 512
    $region21: #{tpu_custom_call.1} parent=1 // pred_fallthru
      _
    %v44 = vld [vmem:[#allocation2] sm:$0xf]
    %v45 = vld [vmem:[#allocation2 + $0x4] sm:$0xf]
    %v46 = vld [vmem:[#allocation5] sm:$0xf]
    %v47 = vld [vmem:[#allocation5 + $0x4] sm:$0xf]
    %v48 = vld [vmem:[#allocation5 + $0x8] sm:$0xf]
    %v49 = vld [vmem:[#allocation5 + $0xc] sm:$0xf]
    %v50 = vld [vmem:[#allocation5 + $0x10] sm:$0xf]
    %v51 = vld [vmem:[#allocation5 + $0x14] sm:$0xf]
    %v52 = vld [vmem:[#allocation5 + $0x18] sm:$0xf]
    %v53 = vld [vmem:[#allocation5 + $0x1c] sm:$0xf]
    %v54 = vld [vmem:[%s2] sm:$0x1]
    %v56 = vlaneseq
    %v57 = vshrl.u32 %v56, 7
    %v58 = vsub.s32 0, %v57
    %v59 = vrot.slane %v54, %v58
    %v63 = vunpack.c.l.b16 %v44
    %v64 = vunpack.c.l.b16 %v45
    %v65 = vpack.c.b16 %v64, %v63
    %v74 = vunpack.c.l.b16 %v46
    %v75 = vunpack.c.l.b16 %v47
    %v76 = vunpack.c.l.b16 %v48
    %v77 = vunpack.c.l.b16 %v49
    %v78 = vunpack.c.l.b16 %v50
    %v79 = vunpack.c.l.b16 %v51
    %v80 = vunpack.c.l.b16 %v52
    %v81 = vunpack.c.l.b16 %v53
    %v82 = vpack.c.b16 %v75, %v74
    %v83 = vpack.c.b16 %v77, %v76
    %v84 = vpack.c.b16 %v79, %v78
    %v85 = vpack.c.b16 %v81, %v80
    %vm90 = vcmask 523264
    %v92 = vsel %vm90, %v65, 0
    %94 = vmatprep.subr.bf16.mxu0 0
    %95 = vmatpush1.bf16.msra.mxu0 %v82
    %96 = vmatprep.subr.bf16.mxu0 0
    %97 = vmatpush1.bf16.msra.mxu0 %v83
    %98 = vmatprep.subr.bf16.mxu0 0
    %99 = vmatpush1.bf16.msra.mxu0 %v84
    %100 = vmatprep.subr.bf16.mxu0 0
    %101 = vmatpush1.bf16.msra.mxu0 %v85
    %102 = vmatprep.subr.bf16.mxu0 0
    %103 = vmatpush1.bf16.msra.mxu0 0
    %104 = vmatprep.subr.bf16.mxu0 0
    %105 = vmatpush1.bf16.msra.mxu0 0
    %106 = vmatprep.subr.bf16.mxu0 0
    %107 = vmatpush1.bf16.msra.mxu0 0
    %108 = vmatprep.subr.bf16.mxu0 0
    %109 = vmatpush1.bf16.msra.mxu0 0
    %110 = vmatprep.subr.bf16.mxu0 0
    %111 = vmatpush1.bf16.msra.mxu0 0
    %112 = vmatprep.subr.bf16.mxu0 0
    %113 = vmatpush1.bf16.msra.mxu0 0
    %114 = vmatprep.subr.bf16.mxu0 0
    %115 = vmatpush1.bf16.msra.mxu0 0
    %116 = vmatprep.subr.bf16.mxu0 0
    %117 = vmatpush1.bf16.msra.mxu0 0
    %118 = vmatprep.subr.bf16.mxu0 0
    %119 = vmatpush1.bf16.msra.mxu0 0
    %120 = vmatprep.subr.bf16.mxu0 0
    %121 = vmatpush1.bf16.msra.mxu0 0
    %122 = vmatprep.subr.bf16.mxu0 0
    %123 = vmatpush1.bf16.msra.mxu0 0
    %124 = vmatprep.subr.bf16.mxu0 0
    %125 = vmatpush1.bf16.msra.mxu0 0
    %126 = vmatprep.mubr.bf16.mxu0 0
    %127 = vmatmul.mubr.bf16.gmra.mrb[0].mxu0 %v92
    %v128 = vpop.f32.mrb[0].mxu0
    %v129 = vadd.f32 %v59, %v128
    %v130 = vpop.f32.mrb[0].mxu0
    %v131 = vpop.f32.mrb[0].mxu0
    %v132 = vadd.f32 %v59, %v131
    %v133 = vpop.f32.mrb[0].mxu0
    %134 = vdwg.mxu0
    %135 = vst [vmem:[#allocation7] sm:$0xff] %v129
    %136 = vst [vmem:[#allocation7 + $0x8] sm:$0xff] %v132
    // Predicated region
    $region22: #{tpu_custom_call.1} parent=1 // pred_check
      _
    $region23: #{tpu_custom_call.1} parent=1 // pred_check_branch
      %138 = sbr.rel (0) target = $region25
    $region24: #{tpu_custom_call.1} parent=1 // pred_region
      %s140 = ssub.s32 256, 256
      %141 = vsyncadd [#allocation4], %s140
      %s142 = sshll.u32 [#allocation7], 4
      %s143 = int_to_ptr.vmem [resolvable:$true] %s142
      %148 = dma.vmem_to_hbm [thread:$0]  %s143, 256, %s3, [#allocation4], 128, 128, 8
    $region25: #{tpu_custom_call.1} parent=1 // pred_fallthru
      _
    // Predicated region
    $region26: #{tpu_custom_call.1} parent=1 // pred_check
      _
    $region27: #{tpu_custom_call.1} parent=1 // pred_check_branch
      %150 = sbr.rel (0) target = $region29
    $region28: #{tpu_custom_call.1} parent=1 // pred_region
      %151 = dma.done [#allocation4], 256
    $region29: #{tpu_custom_call.1} parent=1 // pred_fallthru
      _
    %152 = vsyncpa [#allocation3], 1
    %153 = vsyncpa [#allocation6], 1
    %154 = vsyncpa [#allocation4], 1

</llo_original>
